<compile_context>
chip_gen: v7x
topology: tpu7x:2x2x1
jax: 0.10.0
libtpu: 0.0.40
codegen_flags: <defaults>
</compile_context>

<pallas_src>
import jax
import jax.numpy as jnp
from jax.experimental import pallas as pl
from jax.experimental.pallas import tpu as pltpu


def _loss_vc_partial_kernel(x_ref, sum_ref, sq_ref):
    """One (channel, batch-tile) grid step.

    x_ref  : (Bt, H, W) VMEM tile: one channel of a batch slice (any dtype).
    sum_ref: (8, 128) f32 VMEM output tile, broadcast-filled with the partial
             sum of the 4x4 window sums of this tile.
    sq_ref : (8, 128) f32 VMEM output tile, partial sum of squares.
    """
    _, H, W = x_ref.shape
    Ho, Wo = H - 3, W - 3

    # Cast in-kernel (v5e VPU has no bf16 math; also halves DMA bytes for bf16 inputs).
    x = x_ref[...].astype(jnp.float32)

    # Separable 4x4 all-ones window sum: 3 adds along W, then 3 adds along H.
    # Initialize with the first tap instead of zeros.
    rw = x[:, :, 0:Wo]
    for dj in range(1, 4):
        rw = rw + x[:, :, dj:dj + Wo]
    s = rw[:, 0:Ho, :]
    for di in range(1, 4):
        s = s + rw[:, di:di + Ho, :]

    # One-pass moments; variance is finalized in the wrapper so every grid
    # point is fully independent (both grid axes can be "parallel").
    part_sum = jnp.sum(s)
    part_sq = jnp.sum(s * s)

    # Lane-dense (8,128) output tiles -> unmasked vector stores.
    sum_ref[...] = jnp.full(sum_ref.shape, part_sum, jnp.float32)
    sq_ref[...] = jnp.full(sq_ref.shape, part_sq, jnp.float32)


def _pick_batch_tile(B, H, W, itemsize, budget_bytes=8 << 20):
    """Largest divisor of B whose (Bt, H, W) input block fits the byte budget.

    8 MiB per block keeps 2x double-buffered inputs comfortably under the
    default scoped VMEM limit on all of v5e/v6e/v7x (v7x has only 64 MiB VMEM).
    """
    best = 1
    for bt in range(1, B + 1):
        if B % bt == 0 and bt * H * W * itemsize <= budget_bytes:
            best = bt
    return best


def loss_vc(x, block_b=None):
    """Pallas implementation of torch `loss_vc.forward`. Returns a scalar f32."""
    B, C, H, W = x.shape
    assert C >= 3 and H >= 4 and W >= 4
    Ho, Wo = H - 3, W - 3
    n = B * Ho * Wo                 # elements entering each per-channel variance

    bt = block_b if block_b is not None else _pick_batch_tile(B, H, W, x.dtype.itemsize)
    assert B % bt == 0
    nb = B // bt

    out_shape = jax.ShapeDtypeStruct((3, nb, 8, 128), jnp.float32)
    part_sum, part_sq = pl.pallas_call(
        _loss_vc_partial_kernel,
        out_shape=(out_shape, out_shape),
        grid_spec=pltpu.PrefetchScalarGridSpec(
            num_scalar_prefetch=0,
            grid=(3, nb),
            # Channel picked in the index_map: no wrapper-side x[:, :3] copy,
            # unused channels never touch VMEM. Full H, W per block (no halo
            # needed for the 4x4 window); batch is the tiled/pipelined axis.
            in_specs=[pl.BlockSpec((bt, None, H, W), lambda c, b: (b, c, 0, 0))],
            out_specs=(pl.BlockSpec((None, None, 8, 128), lambda c, b: (c, b, 0, 0)),
                       pl.BlockSpec((None, None, 8, 128), lambda c, b: (c, b, 0, 0))),
        ),
        compiler_params=pltpu.CompilerParams(
            dimension_semantics=("parallel", "parallel")),
    )(x)

    # Tiny epilogue in plain JAX: reduce batch-tile partials, finish variance.
    ch_sum = part_sum[:, :, 0, 0].sum(axis=1)     # (3,) per-channel sum
    ch_sq = part_sq[:, :, 0, 0].sum(axis=1)       # (3,) per-channel sum of squares
    # TODO(synk): for strongly non-zero-mean inputs at very large n, add a
    # per-channel offset to guard the one-pass formula against f32 cancellation.
    var = (ch_sq - ch_sum * ch_sum / n) / (n - 1)  # unbiased variance per channel
    return jnp.sum(var)                            # sum of 3 vars; mean of scalar == scalar


def _reference(x):
    """Pure-JAX reference mirroring the torch module (two-pass variance)."""
    def per_channel(xc):
        B, H, W = xc.shape
        Ho, Wo = H - 3, W - 3
        s = jnp.zeros((B, Ho, Wo), jnp.float32)
        for di in range(4):
            for dj in range(4):
                s = s + xc[:, di:di + Ho, dj:dj + Wo].astype(jnp.float32)
        return jnp.var(s.reshape(-1), ddof=1)
    return per_channel(x[:, 0]) + per_channel(x[:, 1]) + per_channel(x[:, 2])


if __name__ == "__main__":
    key = jax.random.PRNGKey(0)
    x = jax.random.normal(key, (2, 4, 16, 16), dtype=jnp.float32)

    result = jax.block_until_ready(loss_vc(x))
    expected = jax.block_until_ready(_reference(x))

    assert jnp.allclose(result, expected, rtol=1e-4, atol=1e-5), (result, expected)
    print("KERNEL_OK")
</pallas_src>

<mosaic_0001>
module attributes {stable_mosaic.version = 11 : i64} {
  func.func @_loss_vc_partial_kernel(%arg0: i32, %arg1: i32, %arg2: memref<2x1x16x16xf32, #tpu.memory_space<vmem>>, %arg3: memref<1x1x8x128xf32, #tpu.memory_space<vmem>>, %arg4: memref<1x1x8x128xf32, #tpu.memory_space<vmem>>) attributes {dimension_semantics = [#tpu.dimension_semantics<parallel>, #tpu.dimension_semantics<parallel>], iteration_bounds = array<i64: 3, 1>, scalar_prefetch = 0 : i64, scratch_operands = 0 : i64, tpu.core_type = #tpu.core_type<tc>, window_params = [{transform_indices = @transform_0, window_bounds = array<i64: 2, 1, 16, 16>}, {transform_indices = @transform_1, window_bounds = array<i64: 1, 1, 8, 128>}, {transform_indices = @transform_2, window_bounds = array<i64: 1, 1, 8, 128>}]} {
    %c0 = arith.constant 0 : index
    %c0_0 = arith.constant 0 : index
    %c0_1 = arith.constant 0 : index
    %c0_2 = arith.constant 0 : index
    %0 = vector.load %arg2[%c0, %c0_0, %c0_1, %c0_2] : memref<2x1x16x16xf32, #tpu.memory_space<vmem>>, vector<2x1x16x16xf32>
    %1 = vector.shape_cast %0 : vector<2x1x16x16xf32> to vector<2x16x16xf32>
    %2 = vector.extract_strided_slice %1 {offsets = [0, 0, 0], sizes = [2, 16, 13], strides = [1, 1, 1]} : vector<2x16x16xf32> to vector<2x16x13xf32>
    %3 = vector.extract_strided_slice %1 {offsets = [0, 0, 1], sizes = [2, 16, 13], strides = [1, 1, 1]} : vector<2x16x16xf32> to vector<2x16x13xf32>
    %4 = arith.addf %2, %3 : vector<2x16x13xf32>
    %5 = vector.extract_strided_slice %1 {offsets = [0, 0, 2], sizes = [2, 16, 13], strides = [1, 1, 1]} : vector<2x16x16xf32> to vector<2x16x13xf32>
    %6 = arith.addf %4, %5 : vector<2x16x13xf32>
    %7 = vector.extract_strided_slice %1 {offsets = [0, 0, 3], sizes = [2, 16, 13], strides = [1, 1, 1]} : vector<2x16x16xf32> to vector<2x16x13xf32>
    %8 = arith.addf %6, %7 : vector<2x16x13xf32>
    %9 = vector.extract_strided_slice %8 {offsets = [0, 0, 0], sizes = [2, 13, 13], strides = [1, 1, 1]} : vector<2x16x13xf32> to vector<2x13x13xf32>
    %10 = vector.extract_strided_slice %8 {offsets = [0, 1, 0], sizes = [2, 13, 13], strides = [1, 1, 1]} : vector<2x16x13xf32> to vector<2x13x13xf32>
    %11 = arith.addf %9, %10 : vector<2x13x13xf32>
    %12 = vector.extract_strided_slice %8 {offsets = [0, 2, 0], sizes = [2, 13, 13], strides = [1, 1, 1]} : vector<2x16x13xf32> to vector<2x13x13xf32>
    %13 = arith.addf %11, %12 : vector<2x13x13xf32>
    %14 = vector.extract_strided_slice %8 {offsets = [0, 3, 0], sizes = [2, 13, 13], strides = [1, 1, 1]} : vector<2x16x13xf32> to vector<2x13x13xf32>
    %15 = arith.addf %13, %14 : vector<2x13x13xf32>
    %16 = vector.shape_cast %15 : vector<2x13x13xf32> to vector<1x2x13x13xf32>
    %cst = arith.constant dense<0.000000e+00> : vector<1xf32>
    %17 = vector.multi_reduction <add>, %16, %cst [1, 2, 3] : vector<1x2x13x13xf32> to vector<1xf32>
    %18 = vector.shape_cast %17 : vector<1xf32> to vector<1x1x1x1xf32>
    %19 = vector.extract %18[0, 0, 0, 0] : f32 from vector<1x1x1x1xf32>
    %20 = arith.mulf %15, %15 : vector<2x13x13xf32>
    %21 = vector.shape_cast %20 : vector<2x13x13xf32> to vector<1x2x13x13xf32>
    %cst_3 = arith.constant dense<0.000000e+00> : vector<1xf32>
    %22 = vector.multi_reduction <add>, %21, %cst_3 [1, 2, 3] : vector<1x2x13x13xf32> to vector<1xf32>
    %23 = vector.shape_cast %22 : vector<1xf32> to vector<1x1x1x1xf32>
    %24 = vector.extract %23[0, 0, 0, 0] : f32 from vector<1x1x1x1xf32>
    %25 = vector.broadcast %19 : f32 to vector<8x128xf32>
    %c0_4 = arith.constant 0 : index
    %c0_5 = arith.constant 0 : index
    %c0_6 = arith.constant 0 : index
    %c0_7 = arith.constant 0 : index
    %26 = vector.load %arg3[%c0_4, %c0_5, %c0_6, %c0_7] : memref<1x1x8x128xf32, #tpu.memory_space<vmem>>, vector<1x1x8x128xf32>
    %27 = vector.shape_cast %26 : vector<1x1x8x128xf32> to vector<8x128xf32>
    %28 = vector.shape_cast %25 : vector<8x128xf32> to vector<1x1x8x128xf32>
    tpu.vector_store %arg3[%c0_4, %c0_5, %c0_6, %c0_7], %28 {strides = array<i32>} : memref<1x1x8x128xf32, #tpu.memory_space<vmem>>, vector<1x1x8x128xf32>,
    %29 = vector.broadcast %24 : f32 to vector<8x128xf32>
    %c0_8 = arith.constant 0 : index
    %c0_9 = arith.constant 0 : index
    %c0_10 = arith.constant 0 : index
    %c0_11 = arith.constant 0 : index
    %30 = vector.load %arg4[%c0_8, %c0_9, %c0_10, %c0_11] : memref<1x1x8x128xf32, #tpu.memory_space<vmem>>, vector<1x1x8x128xf32>
    %31 = vector.shape_cast %30 : vector<1x1x8x128xf32> to vector<8x128xf32>
    %32 = vector.shape_cast %29 : vector<8x128xf32> to vector<1x1x8x128xf32>
    tpu.vector_store %arg4[%c0_8, %c0_9, %c0_10, %c0_11], %32 {strides = array<i32>} : memref<1x1x8x128xf32, #tpu.memory_space<vmem>>, vector<1x1x8x128xf32>,
    return
  }
  func.func @transform_0(%arg0: i32, %arg1: i32) -> (i32, i32, i32, i32) {
    %c0_i32 = arith.constant 0 : i32
    %c0_i32_0 = arith.constant 0 : i32
    %c0_i32_1 = arith.constant 0 : i32
    return %arg1, %arg0, %c0_i32, %c0_i32_0 : i32, i32, i32, i32
  }
  func.func @transform_1(%arg0: i32, %arg1: i32) -> (i32, i32, i32, i32) {
    %c0_i32 = arith.constant 0 : i32
    %c0_i32_0 = arith.constant 0 : i32
    %c0_i32_1 = arith.constant 0 : i32
    return %arg0, %arg1, %c0_i32, %c0_i32_0 : i32, i32, i32, i32
  }
  func.func @transform_2(%arg0: i32, %arg1: i32) -> (i32, i32, i32, i32) {
    %c0_i32 = arith.constant 0 : i32
    %c0_i32_0 = arith.constant 0 : i32
    %c0_i32_1 = arith.constant 0 : i32
    return %arg0, %arg1, %c0_i32, %c0_i32_0 : i32, i32, i32, i32
  }
}

</mosaic_0001>

<llo_original>
// kernel: tpu_custom_call.1
$region0: #{tpu_custom_call.1}
  #allocation0 [shape = 'u32[]', space=smem, size = 0x4, offset = 0x4, fixed_abs, tag = 'smem constant byte address 0x4 - core index']
  #allocation1 [shape = 'u32[144,128]{1,0:T(1,128)}', space=vmem, size = 0x12000, scoped, tag = 'internal scratch']
  #allocation8 [shape = 's32[]', space=sflag, size = 0x4, offset = 0, fixed_abs, tag = 'sflag constant byte address 0x0 - dummy sync flag']
  %s0 = inlined_call_operand.hbm [shape: f32[2,4,16,16], index: 0, kind: input, shape index: {}]
  %s1 = inlined_call_operand.hbm [shape: f32[3,1,8,128], index: 1, kind: output, shape index: {0}]
  %s2 = inlined_call_operand.hbm [shape: f32[3,1,8,128], index: 2, kind: output, shape index: {1}]
  %3 = xla_tuple %s1, %s2
  %s4 = sld [smem:[#allocation0]]
  $region49: #{tpu_custom_call.1} parent=0
    _
  %s6 = ssub.s32 1, %s4
  %s7 = scalar_select 0, %s6, %s4
  $region1: #{tpu_custom_call.1} parent=0
    #allocation2 [shape = 'u8[32768]{0}', space=vmem, size = 0x8000, scoped, tag = 'input window, operand 0']
    #allocation3 [shape = 's32[2]{0}', space=sflag, size = 0x8, scoped, tag = 'scoped memory for tpu_custom_call.1']
    #allocation4 [shape = 's32[2]{0}', space=sflag, size = 0x8, scoped, tag = 'scoped memory for tpu_custom_call.1']
    #allocation5 [shape = 'u8[8192]{0}', space=vmem, size = 0x2000, scoped, tag = 'output window, operand 0']
    #allocation6 [shape = 'u8[8192]{0}', space=vmem, size = 0x2000, scoped, tag = 'output window, operand 1']
    #allocation7 [shape = 's32[2]{0}', space=sflag, size = 0x8, scoped, tag = 'scoped memory for tpu_custom_call.1']
    %8 = vsyncpa [#allocation3], 0
    %s9 = scalar_lea.sflag [#allocation3], 1
    %10 = vsyncpa %s9, 0
    %11 = vsyncpa [#allocation4], 0
    %s12 = scalar_lea.sflag [#allocation4], 1
    %13 = vsyncpa %s12, 0
    %14 = vsyncpa [#allocation7], 0
    %s15 = scalar_lea.sflag [#allocation7], 1
    %16 = vsyncpa %s15, 0
    loop: start=0, step=1, limit=5
    $region2: #{tpu_custom_call.1} parent=1 // loop_pre_header
      _
    $region3: #{tpu_custom_call.1} parent=1 // loop_header
      %s18 = sphi 0, %s22
      %p19 = scmp.ge.s32.totalorder %s18, 5
      %s25 = sphi 0, %s37
      %s26 = sphi 0, %s33
      %s27 = sphi 0, %s25
      %s28 = sphi 0, %s26
      %s29 = sphi 0, %s27
      %s30 = sphi 0, %s28
      %s42 = sphi 0, %s44
      %s45 = sphi 0, %s42
      %s46 = sphi 0, %s45
      %s62 = sphi 0, %s46
      %s70 = sphi 0, %s72
      %s73 = sphi 0, %s70
      %s74 = sphi 0, %s73
      %s90 = sphi 0, %s74
      %s98 = sphi 0, %s100
      %s101 = sphi 0, %s98
      %s102 = sphi 0, %s101
      %s118 = sphi 0, %s102
    $region4: #{tpu_custom_call.1} parent=1 // loop_header_branch
      %21 = sbr.rel (%p19) target = $region8
    $region5: #{tpu_custom_call.1} parent=1 // loop_body
      %s23 = ssub.s32 %s18, 1
      %s24 = ssub.s32 %s18, 2
      %s31 = sadd.s32 1, %s26
      %p32 = scmp.ge.s32.totalorder %s31, 1
      %s33 = scalar_select %p32, 0, %s31
      %s34 = sadd.s32 1, %s25
      %s35 = scalar_select %p32, %s34, %s25
      %p36 = scmp.ge.s32.totalorder %s35, 3
      %s37 = scalar_select %p36, 0, %s35
      %s38 = ssub.s32 %s26, %s33
      %s39 = ssub.s32 %s25, %s37
      %s40 = sor.u32 %s38, %s39
      %p41 = scmp.eq.s32.totalorder %s40, 0
      %s43 = sadd.s32 %s42, 1
      %s44 = scalar_select %p41, %s42, %s43
      %p47 = pneg %p41
      %p48 = scmp.eq.s32.totalorder %s18, 2
      %p49 = por %p47, %p48
      %p50 = scmp.ne.s32.totalorder %s42, %s45
      %p51 = scmp.eq.s32.totalorder %s18, 0
      %p52 = por %p50, %p51
      %p53 = scmp.ne.s32.totalorder %s42, %s45
      %p54 = scmp.eq.s32.totalorder %s23, 2
      %p55 = por %p53, %p54
      %p56 = scmp.ne.s32.totalorder %s45, %s46
      %p57 = scmp.eq.s32.totalorder %s23, 0
      %p58 = por %p56, %p57
      %p59 = scmp.ne.s32.totalorder %s45, %s46
      %p60 = scmp.eq.s32.totalorder %s24, 2
      %p61 = por %p59, %p60
      %p63 = scmp.ne.s32.totalorder %s46, %s62
      %p64 = scmp.eq.s32.totalorder %s24, 0
      %p65 = por %p63, %p64
      %s66 = ssub.s32 %s25, %s37
      %s67 = ssub.s32 %s26, %s33
      %s68 = sor.u32 %s66, %s67
      %p69 = scmp.eq.s32.totalorder %s68, 0
      %s71 = sadd.s32 %s70, 1
      %s72 = scalar_select %p69, %s70, %s71
      %p75 = pneg %p69
      %p76 = scmp.eq.s32.totalorder %s18, 2
      %p77 = por %p75, %p76
      %p78 = scmp.ne.s32.totalorder %s70, %s73
      %p79 = scmp.eq.s32.totalorder %s18, 0
      %p80 = por %p78, %p79
      %p81 = scmp.ne.s32.totalorder %s70, %s73
      %p82 = scmp.eq.s32.totalorder %s23, 2
      %p83 = por %p81, %p82
      %p84 = scmp.ne.s32.totalorder %s73, %s74
      %p85 = scmp.eq.s32.totalorder %s23, 0
      %p86 = por %p84, %p85
      %p87 = scmp.ne.s32.totalorder %s73, %s74
      %p88 = scmp.eq.s32.totalorder %s24, 2
      %p89 = por %p87, %p88
      %p91 = scmp.ne.s32.totalorder %s74, %s90
      %p92 = scmp.eq.s32.totalorder %s24, 0
      %p93 = por %p91, %p92
      %s94 = ssub.s32 %s25, %s37
      %s95 = ssub.s32 %s26, %s33
      %s96 = sor.u32 %s94, %s95
      %p97 = scmp.eq.s32.totalorder %s96, 0
      %s99 = sadd.s32 %s98, 1
      %s100 = scalar_select %p97, %s98, %s99
      %p103 = pneg %p97
      %p104 = scmp.eq.s32.totalorder %s18, 2
      %p105 = por %p103, %p104
      %p106 = scmp.ne.s32.totalorder %s98, %s101
      %p107 = scmp.eq.s32.totalorder %s18, 0
      %p108 = por %p106, %p107
      %p109 = scmp.ne.s32.totalorder %s98, %s101
      %p110 = scmp.eq.s32.totalorder %s23, 2
      %p111 = por %p109, %p110
      %p112 = scmp.ne.s32.totalorder %s101, %s102
      %p113 = scmp.eq.s32.totalorder %s23, 0
      %p114 = por %p112, %p113
      %p115 = scmp.ne.s32.totalorder %s101, %s102
      %p116 = scmp.eq.s32.totalorder %s24, 2
      %p117 = por %p115, %p116
      %p119 = scmp.ne.s32.totalorder %s102, %s118
      %p120 = scmp.eq.s32.totalorder %s24, 0
      %p121 = por %p119, %p120
      %p122 = scmp.le.s32.totalorder 1, %s18
      %p123 = scmp.lt.s32.totalorder %s18, 4
      %p124 = pnand %p122, %p123
      %p125 = pneg %p124
      // Predicated region
      $region9: #{tpu_custom_call.1} parent=5 // pred_check
        _
      $region10: #{tpu_custom_call.1} parent=5 // pred_check_branch
        %127 = sbr.rel (%p124) target = $region12
      $region11: #{tpu_custom_call.1} parent=5 // pred_region
        %s128 = ssub.s32 %s18, 1
      $region12: #{tpu_custom_call.1} parent=5 // pred_fallthru
        _
      %p129 = scmp.lt.s32.totalorder %s18, 3
      // Predicated region
      $region13: #{tpu_custom_call.1} parent=5 // pred_check
        %p130 = pneg %p129
      $region14: #{tpu_custom_call.1} parent=5 // pred_check_branch
        %132 = sbr.rel (%p130) target = $region16
      $region15: #{tpu_custom_call.1} parent=5 // pred_region
        // Predicated region
        $region17: #{tpu_custom_call.1} parent=15 // pred_check
          %p133 = pneg %p52
        $region18: #{tpu_custom_call.1} parent=15 // pred_check_branch
          %135 = sbr.rel (%p133) target = $region20
        $region19: #{tpu_custom_call.1} parent=15 // pred_region
          #allocation9 [shape = 'u32[6]{0}', space=smem, size = 0x18, scoped, tag = 'DMA stride descriptor']
          %s136 = sand.u32 %s42, 1
          %s137 = scalar_lea.sflag [#allocation3], %s136
          %s138 = sand.u32 %s42, 1
          %s139 = smul.addr %s138, 32
          %s140 = scalar_lea.vmem [#allocation2], %s139
          %s141 = smul.u32 2, %s26
          %s143 = ssub.s32 512, 512
          %144 = vsyncadd %s137, %s143
          %s145 = smul.addr %s25, 2
          %s146 = smul.addr %s141, 8
          %s147 = sadd.s32 %s145, %s146
          %s148 = smul.addr %s147, 128
          %s149 = scalar_lea.hbm %s0, %s148
          %s151 = sshll.u32 1, 14
          %s152 = sxor.u32 4294967295, %s151
          %s154 = sld [smem:[#allocation0]]
          %s155 = sadd.s32 2, %s154
          %s157 = sshll.u32 7, 26
          %s158 = sxor.u32 4294967295, %s157
          %s159 = sand.u32 0, %s158
          %s160 = sshll.u32 %s155, 26
          %s161 = sor.u32 %s159, %s160
          %s162 = sshll.u32 %s140, 4
          %s163 = int_to_ptr.vmem [resolvable:$true] %s162
          %169 = sst [smem:[#allocation9]] 1024
          %s170 = scalar_lea.smem [#allocation9], 1
          %171 = sst [smem:[%s170]] 256
          %s172 = scalar_lea.smem [#allocation9], 2
          %173 = sst [smem:[%s172]] 2
          %s174 = scalar_lea.smem [#allocation9], 3
          %175 = sst [smem:[%s174]] 128
          %s176 = scalar_lea.smem [#allocation9], 4
          %177 = sst [smem:[%s176]] 128
          %s178 = scalar_lea.smem [#allocation9], 5
          %179 = sst [smem:[%s178]] 8
          %181 = dma.general %s149, 512, %s163, %s137, [#allocation8], [#allocation9], %s161, 0
        $region20: #{tpu_custom_call.1} parent=15 // pred_fallthru
          _
      $region16: #{tpu_custom_call.1} parent=5 // pred_fallthru
        _
      %p182 = scmp.le.s32.totalorder 1, %s18
      %p183 = scmp.lt.s32.totalorder %s18, 4
      %p184 = pnand %p182, %p183
      %p185 = pneg %p184
      // Predicated region
      $region21: #{tpu_custom_call.1} parent=5 // pred_check
        _
      $region22: #{tpu_custom_call.1} parent=5 // pred_check_branch
        %187 = sbr.rel (%p184) target = $region24
      $region23: #{tpu_custom_call.1} parent=5 // pred_region
        %s188 = ssub.s32 %s18, 1
        %s189 = sand.u32 %s45, 1
        %s190 = scalar_lea.sflag [#allocation3], %s189
        %s191 = sand.u32 %s45, 1
        %s192 = smul.addr %s191, 32
        %s193 = scalar_lea.vmem [#allocation2], %s192
        // Predicated region
        $region25: #{tpu_custom_call.1} parent=23 // pred_check
          %p194 = pneg %p58
        $region26: #{tpu_custom_call.1} parent=23 // pred_check_branch
          %196 = sbr.rel (%p194) target = $region28
        $region27: #{tpu_custom_call.1} parent=23 // pred_region
          %197 = dma.done %s190, 512
        $region28: #{tpu_custom_call.1} parent=23 // pred_fallthru
          _
        %s198 = sand.u32 %s45, 1
        %s199 = scalar_lea.sflag [#allocation3], %s198
        %s200 = sand.u32 %s45, 1
        %s201 = smul.addr %s200, 32
        %s202 = scalar_lea.vmem [#allocation2], %s201
        %p203 = pneg %p58
        %p204 = pneg %p55
        %p205 = pneg %p86
        %p206 = pneg %p83
        %s207 = sand.u32 %s73, 1
        %s208 = scalar_lea.sflag [#allocation4], %s207
        %s209 = sand.u32 %s73, 1
        %s210 = smul.addr %s209, 8
        %s211 = scalar_lea.vmem [#allocation5], %s210
        %p212 = pneg %p114
        %p213 = pneg %p111
        %s214 = sand.u32 %s101, 1
        %s215 = scalar_lea.sflag [#allocation7], %s214
        %s216 = sand.u32 %s101, 1
        %s217 = smul.addr %s216, 8
        %s218 = scalar_lea.vmem [#allocation6], %s217
        %s219 = smul.u32 2, %s28
        %v220 = vld [vmem:[%s193] sm:$0xff]
        %v221 = vld [vmem:[%s193 + $0x8] sm:$0xff]
        %v222 = vld [vmem:[%s193 + $0x10] sm:$0xff]
        %v223 = vld [vmem:[%s193 + $0x18] sm:$0xff]
        %228 = vrot.lane.b32.xlu0 %v220, 127
        %v229 = vpop.permute.xlu0 %228
        %230 = vrot.lane.b32.xlu0 %v221, 127
        %v231 = vpop.permute.xlu0 %230
        %232 = vrot.lane.b32.xlu0 %v222, 127
        %v233 = vpop.permute.xlu0 %232
        %234 = vrot.lane.b32.xlu0 %v223, 127
        %v235 = vpop.permute.xlu0 %234
        %v240 = vadd.f32 %v220, %v229
        %v241 = vadd.f32 %v221, %v231
        %v242 = vadd.f32 %v222, %v233
        %v243 = vadd.f32 %v223, %v235
        %244 = vrot.lane.b32.xlu0 %v220, 126
        %v245 = vpop.permute.xlu0 %244
        %246 = vrot.lane.b32.xlu0 %v221, 126
        %v247 = vpop.permute.xlu0 %246
        %248 = vrot.lane.b32.xlu0 %v222, 126
        %v249 = vpop.permute.xlu0 %248
        %250 = vrot.lane.b32.xlu0 %v223, 126
        %v251 = vpop.permute.xlu0 %250
        %v256 = vadd.f32 %v240, %v245
        %v257 = vadd.f32 %v241, %v247
        %v258 = vadd.f32 %v242, %v249
        %v259 = vadd.f32 %v243, %v251
        %260 = vrot.lane.b32.xlu0 %v220, 125
        %v261 = vpop.permute.xlu0 %260
        %262 = vrot.lane.b32.xlu0 %v221, 125
        %v263 = vpop.permute.xlu0 %262
        %264 = vrot.lane.b32.xlu0 %v222, 125
        %v265 = vpop.permute.xlu0 %264
        %266 = vrot.lane.b32.xlu0 %v223, 125
        %v267 = vpop.permute.xlu0 %266
        %v272 = vadd.f32 %v256, %v261
        %v273 = vadd.f32 %v257, %v263
        %v274 = vadd.f32 %v258, %v265
        %v275 = vadd.f32 %v259, %v267
        %vm280 = vcmask 1046528
        %v281 = vrot.slane %v272, 1
        %v282 = vrot.slane %v273, 1
        %v283 = vsel %vm280, %v281, %v282
        %v284 = vrot.slane %v274, 1
        %v285 = vrot.slane %v275, 1
        %v286 = vsel %vm280, %v284, %v285
        %v291 = vadd.f32 %v272, %v283
        %v292 = vadd.f32 %v273, %v282
        %v293 = vadd.f32 %v274, %v286
        %v294 = vadd.f32 %v275, %v285
        %vm295 = vcmask 1045504
        %v296 = vrot.slane %v272, 2
        %v297 = vrot.slane %v273, 2
        %v298 = vsel %vm295, %v296, %v297
        %v299 = vrot.slane %v274, 2
        %v300 = vrot.slane %v275, 2
        %v301 = vsel %vm295, %v299, %v300
        %v306 = vadd.f32 %v291, %v298
        %v307 = vadd.f32 %v292, %v297
        %v308 = vadd.f32 %v293, %v301
        %v309 = vadd.f32 %v294, %v300
        %vm310 = vcmask 1044480
        %v311 = vrot.slane %v272, 3
        %v312 = vrot.slane %v273, 3
        %v313 = vsel %vm310, %v311, %v312
        %v314 = vrot.slane %v274, 3
        %v315 = vrot.slane %v275, 3
        %v316 = vsel %vm310, %v314, %v315
        %v321 = vadd.f32 %v306, %v313
        %v322 = vadd.f32 %v307, %v312
        %v323 = vadd.f32 %v308, %v316
        %v324 = vadd.f32 %v309, %v315
        %vm325 = vcmask 105472
        %v326 = vsel %vm325, %v321, 0.0
        %vm327 = vcmask 102400
        %v328 = vsel %vm327, %v322, 0.0
        %v329 = vadd.f32 %v326, %v328
        %v330 = vsel %vm325, %v323, 0.0
        %v331 = vadd.f32 %v329, %v330
        %v332 = vsel %vm327, %v324, 0.0
        %v333 = vadd.f32 %v331, %v332
        %334 = vadd.xlane.f32.xlu0 %v333
        %v335 = vpop.xlane.xlu0 %334
        %v336 = vrot.slane %v335, 4
        %v337 = vadd.f32 %v335, %v336
        %v338 = vrot.slane %v337, 2
        %v339 = vadd.f32 %v337, %v338
        %v340 = vrot.slane %v339, 1
        %v341 = vadd.f32 %v339, %v340
        %s342 = vtos %v341
        %v343 = vmul.f32 %v321, %v321
        %v344 = vmul.f32 %v322, %v322
        %v345 = vmul.f32 %v323, %v323
        %v346 = vmul.f32 %v324, %v324
        %v347 = vsel %vm325, %v343, 0.0
        %v348 = vsel %vm327, %v344, 0.0
        %v349 = vadd.f32 %v347, %v348
        %v350 = vsel %vm325, %v345, 0.0
        %v351 = vadd.f32 %v349, %v350
        %v352 = vsel %vm327, %v346, 0.0
        %v353 = vadd.f32 %v351, %v352
        %354 = vadd.xlane.f32.xlu0 %v353
        %v355 = vpop.xlane.xlu0 %354
        %v356 = vrot.slane %v355, 4
        %v357 = vadd.f32 %v355, %v356
        %v358 = vrot.slane %v357, 2
        %v359 = vadd.f32 %v357, %v358
        %v360 = vrot.slane %v359, 1
        %v361 = vadd.f32 %v359, %v360
        %s362 = vtos %v361
        %v363 = vstv %s342
        %364 = vst [vmem:[%s211] sm:$0xff] %v363
        %v365 = vstv %s362
        %366 = vst [vmem:[%s218] sm:$0xff] %v365
        %s367 = sand.u32 %s73, 1
        %s368 = scalar_lea.sflag [#allocation4], %s367
        %s369 = sand.u32 %s73, 1
        %s370 = smul.addr %s369, 8
        %s371 = scalar_lea.vmem [#allocation5], %s370
        %s372 = sand.u32 %s101, 1
        %s373 = scalar_lea.sflag [#allocation7], %s372
        %s374 = sand.u32 %s101, 1
        %s375 = smul.addr %s374, 8
        %s376 = scalar_lea.vmem [#allocation6], %s375
        // Predicated region
        $region29: #{tpu_custom_call.1} parent=23 // pred_check
          %p377 = pneg %p83
        $region30: #{tpu_custom_call.1} parent=23 // pred_check_branch
          %379 = sbr.rel (%p377) target = $region32
        $region31: #{tpu_custom_call.1} parent=23 // pred_region
          %s381 = ssub.s32 128, 128
          %382 = vsyncadd %s368, %s381
          %s383 = sadd.s32 %s28, %s27
          %s384 = smul.addr %s383, 128
          %s385 = scalar_lea.hbm %s1, %s384
          %s387 = sshll.u32 %s371, 4
          %s388 = int_to_ptr.vmem [resolvable:$true] %s387
          %390 = dma.vmem_to_hbm [thread:$0]  %s388, 128, %s385, %s368
        $region32: #{tpu_custom_call.1} parent=23 // pred_fallthru
          _
        // Predicated region
        $region33: #{tpu_custom_call.1} parent=23 // pred_check
          %p391 = pneg %p111
        $region34: #{tpu_custom_call.1} parent=23 // pred_check_branch
          %393 = sbr.rel (%p391) target = $region36
        $region35: #{tpu_custom_call.1} parent=23 // pred_region
          %s395 = ssub.s32 128, 128
          %396 = vsyncadd %s373, %s395
          %s397 = sadd.s32 %s28, %s27
          %s398 = smul.addr %s397, 128
          %s399 = scalar_lea.hbm %s2, %s398
          %s401 = sshll.u32 %s376, 4
          %s402 = int_to_ptr.vmem [resolvable:$true] %s401
          %404 = dma.vmem_to_hbm [thread:$0]  %s402, 128, %s399, %s373
        $region36: #{tpu_custom_call.1} parent=23 // pred_fallthru
          _
      $region24: #{tpu_custom_call.1} parent=5 // pred_fallthru
        _
      %p405 = scmp.le.s32.totalorder 2, %s18
      // Predicated region
      $region37: #{tpu_custom_call.1} parent=5 // pred_check
        %p406 = pneg %p405
      $region38: #{tpu_custom_call.1} parent=5 // pred_check_branch
        %408 = sbr.rel (%p406) target = $region40
      $region39: #{tpu_custom_call.1} parent=5 // pred_region
        %s409 = ssub.s32 %s18, 2
        // Predicated region
        $region41: #{tpu_custom_call.1} parent=39 // pred_check
          %p410 = pneg %p89
        $region42: #{tpu_custom_call.1} parent=39 // pred_check_branch
          %412 = sbr.rel (%p410) target = $region44
        $region43: #{tpu_custom_call.1} parent=39 // pred_region
          %s413 = sand.u32 %s74, 1
          %s414 = scalar_lea.sflag [#allocation4], %s413
          %s415 = sand.u32 %s74, 1
          %s416 = smul.addr %s415, 8
          %s417 = scalar_lea.vmem [#allocation5], %s416
          %418 = dma.done %s414, 128
        $region44: #{tpu_custom_call.1} parent=39 // pred_fallthru
          _
        // Predicated region
        $region45: #{tpu_custom_call.1} parent=39 // pred_check
          %p419 = pneg %p117
        $region46: #{tpu_custom_call.1} parent=39 // pred_check_branch
          %421 = sbr.rel (%p419) target = $region48
        $region47: #{tpu_custom_call.1} parent=39 // pred_region
          %s422 = sand.u32 %s102, 1
          %s423 = scalar_lea.sflag [#allocation7], %s422
          %s424 = sand.u32 %s102, 1
          %s425 = smul.addr %s424, 8
          %s426 = scalar_lea.vmem [#allocation6], %s425
          %427 = dma.done %s423, 128
        $region48: #{tpu_custom_call.1} parent=39 // pred_fallthru
          _
      $region40: #{tpu_custom_call.1} parent=5 // pred_fallthru
        _
    $region6: #{tpu_custom_call.1} parent=1 // loop_footer
      %s22 = sadd.s32 1, %s18
    $region7: #{tpu_custom_call.1} parent=1 // loop_footer_branch
      %17 = sbr.rel target = $region3
    $region8: #{tpu_custom_call.1} parent=1 // loop_exit
      _
    %428 = vsyncpa [#allocation3], 1
    %s429 = scalar_lea.sflag [#allocation3], 1
    %430 = vsyncpa %s429, 1
    %431 = vsyncpa [#allocation4], 1
    %s432 = scalar_lea.sflag [#allocation4], 1
    %433 = vsyncpa %s432, 1
    %434 = vsyncpa [#allocation7], 1
    %s435 = scalar_lea.sflag [#allocation7], 1
    %436 = vsyncpa %s435, 1

</llo_original>
